<compile_context>
chip_gen: v7x
topology: tpu7x:2x2x1
jax: 0.10.0
libtpu: 0.0.40
codegen_flags: <defaults>
</compile_context>

<pallas_src>
import jax
import jax.numpy as jnp
from jax.experimental import pallas as pl
from jax.experimental.pallas import tpu as pltpu


def _copy_kernel(x_ref, o_ref):
    # x_ref: (tb, hw) grayscale rows (same block for every channel step).
    # o_ref: (tb, hw) slice of the flat (B, 3*hw) output at channel offset
    #        c*hw.  Single full-block, lane-0-aligned store.
    o_ref[...] = x_ref[...]


def _sublane_multiple(dtype):
    """Sublane packing multiple: 8 for 32-bit, 16 for 16-bit, 32 for 8-bit."""
    itemsize = jnp.dtype(dtype).itemsize
    if itemsize >= 4:
        return 8
    return 8 * (4 // itemsize)


def _round_down(x, m):
    return (x // m) * m


def _choose_block_rows(batch, hw, dtype, vmem_budget_bytes, min_block_bytes):
    """Images per grid step along the batch axis.

    Balances: (a) double-buffered VMEM footprint <= vmem_budget_bytes,
    (b) ~8 row blocks so the DMA pipeline has a steady state and v7x's two
    TensorCores both get work on the "parallel" axis, (c) each DMA is at least
    min_block_bytes so per-step overhead (~0.35 us) is amortized.
    """
    itemsize = jnp.dtype(dtype).itemsize
    mult = _sublane_multiple(dtype)
    row_bytes = hw * itemsize
    # double-buffered (input block + output block) per grid step = 4 * tb * row_bytes
    budget_rows = max(1, vmem_budget_bytes // (4 * row_bytes))
    steps_rows = -(-batch // 8)                      # rows giving ~8 row blocks
    min_rows = -(-min_block_bytes // row_bytes)      # rows giving >= min_block_bytes
    tb = min(budget_rows, max(steps_rows, min_rows))
    tb = max(mult, _round_down(tb, mult))            # never below one sublane tile
    if tb >= batch:
        return batch                                 # one block == full batch dim (legal)
    return tb


def bw_1_to_3ch(x, data_format="NCHW", *,
                vmem_budget_bytes=16 << 20,
                min_block_bytes=1 << 20,
                tiny_fallback_bytes=16 << 10):
    """Pallas implementation of bw_1_to_3ch for NCHW images (any dtype)."""
    if data_format != "NCHW":
        # TODO(synk): NHWC (channel-last) broadcast interleaves along the lane
        # axis; not implemented as a Pallas kernel here.
        raise NotImplementedError("only data_format='NCHW' is supported")
    B, C, H, W = x.shape
    assert C == 1, f"bw_1_to_3ch expects a single input channel, got C={C}"

    hw = H * W
    itemsize = jnp.dtype(x.dtype).itemsize
    in_bytes = B * hw * itemsize

    if in_bytes <= tiny_fallback_bytes:
        # Fixed pallas_call + pipeline prologue/epilogue overhead dominates for
        # tiny tensors; a plain broadcast is faster and exactly equivalent.
        return jnp.broadcast_to(x, (B, 3, H, W))

    x_flat = x.reshape(B, hw)                         # native dtype, no cast
    tb = _choose_block_rows(B, hw, x.dtype, vmem_budget_bytes, min_block_bytes)
    row_blocks = pl.cdiv(B, tb)                       # ragged final block is masked

    # Per-step VMEM footprint: double-buffered input block + output block.
    footprint = 4 * tb * hw * itemsize
    vmem_limit = 32 << 20                             # safe default on v5e/v6e/v7x
    if footprint > (vmem_limit - (8 << 20)):
        # TODO(synk): for very large H*W also tile the lane axis; for now raise
        # the scoped limit but stay under v7x's 64 MiB physical VMEM.
        vmem_limit = min(footprint + (8 << 20), 48 << 20)

    out_flat = pl.pallas_call(
        _copy_kernel,
        out_shape=jax.ShapeDtypeStruct((B, 3 * hw), x.dtype),
        grid_spec=pltpu.PrefetchScalarGridSpec(
            num_scalar_prefetch=0,
            grid=(row_blocks, 3),
            # Input block index constant across c -> fetched once per row block.
            in_specs=[pl.BlockSpec((tb, hw), lambda i, c: (i, 0))],
            # Output block index follows c -> three full-block channel writes.
            out_specs=pl.BlockSpec((tb, hw), lambda i, c: (i, c)),
        ),
        compiler_params=pltpu.CompilerParams(
            dimension_semantics=("parallel", "arbitrary"),
            vmem_limit_bytes=vmem_limit),
        cost_estimate=pl.CostEstimate(
            flops=0, transcendentals=0, bytes_accessed=4 * in_bytes),
    )(x_flat)

    # Row-major layout of (B, 3*hw) matches (B, 3, H, W): free metadata reshape.
    return out_flat.reshape(B, 3, H, W)


def bw_one_to_three_ch(t, data_format="NCHW", include_label=False):
    """Forward pass of BWOneToThreeCh on the tuple t = (x, y)."""
    x, y = t
    x = bw_1_to_3ch(x, data_format)
    if include_label:
        y = bw_1_to_3ch(y, data_format)
    return x, y


if __name__ == "__main__":
    key = jax.random.PRNGKey(0)
    kx, ky, kt = jax.random.split(key, 3)

    # Main path: Pallas kernel (48 KiB input, above the tiny-tensor threshold),
    # H*W = 1024 lanes -> lane-aligned full-block stores.
    B, H, W = 12, 32, 32
    x = jax.random.uniform(kx, (B, 1, H, W), dtype=jnp.float32)
    y = jax.random.randint(ky, (B,), 0, 10)

    x_out, y_out = bw_one_to_three_ch((x, y))
    jax.block_until_ready(x_out)
    jax.block_until_ready(y_out)
    assert x_out.shape == (B, 3, H, W) and x_out.dtype == x.dtype
    assert jnp.array_equal(x_out, jnp.broadcast_to(x, (B, 3, H, W)))
    assert (y_out == y).all()

    # Multi-block + ragged final block path (B=12, tb=8 -> grid rows = 2).
    x_rag = bw_1_to_3ch(x, vmem_budget_bytes=128 << 10, min_block_bytes=8 << 10)
    jax.block_until_ready(x_rag)
    assert jnp.array_equal(x_rag, jnp.broadcast_to(x, (B, 3, H, W)))

    # include_label=True with an image-valued label of the same shape.
    yl = jax.random.uniform(kt, (B, 1, H, W), dtype=jnp.float32)
    x_out2, y_out2 = bw_one_to_three_ch((x, yl), include_label=True)
    jax.block_until_ready(x_out2)
    jax.block_until_ready(y_out2)
    assert jnp.array_equal(y_out2, jnp.broadcast_to(yl, (B, 3, H, W)))

    # Tiny-tensor fallback path (below the fixed-overhead threshold).
    xt = jax.random.uniform(kx, (2, 1, 16, 16), dtype=jnp.float32)
    xt_out, _ = bw_one_to_three_ch((xt, y))
    jax.block_until_ready(xt_out)
    assert jnp.array_equal(xt_out, jnp.broadcast_to(xt, (2, 3, 16, 16)))

    print("KERNEL_OK")
</pallas_src>

<mosaic_0001>
module attributes {stable_mosaic.version = 11 : i64} {
  func.func @_copy_kernel(%arg0: i32, %arg1: i32, %arg2: memref<12x1024xf32, #tpu.memory_space<vmem>>, %arg3: memref<12x1024xf32, #tpu.memory_space<vmem>>) attributes {dimension_semantics = [#tpu.dimension_semantics<parallel>, #tpu.dimension_semantics<arbitrary>], iteration_bounds = array<i64: 1, 3>, scalar_prefetch = 0 : i64, scratch_operands = 0 : i64, tpu.core_type = #tpu.core_type<tc>, window_params = [{transform_indices = @transform_0, window_bounds = array<i64: 12, 1024>}, {transform_indices = @transform_1, window_bounds = array<i64: 12, 1024>}]} {
    %c0 = arith.constant 0 : index
    %c0_0 = arith.constant 0 : index
    %0 = vector.load %arg2[%c0, %c0_0] : memref<12x1024xf32, #tpu.memory_space<vmem>>, vector<12x1024xf32>
    %c0_1 = arith.constant 0 : index
    %c0_2 = arith.constant 0 : index
    %1 = vector.load %arg3[%c0_1, %c0_2] : memref<12x1024xf32, #tpu.memory_space<vmem>>, vector<12x1024xf32>
    tpu.vector_store %arg3[%c0_1, %c0_2], %0 {strides = array<i32>} : memref<12x1024xf32, #tpu.memory_space<vmem>>, vector<12x1024xf32>,
    return
  }
  func.func @transform_0(%arg0: i32, %arg1: i32) -> (i32, i32) {
    %c0_i32 = arith.constant 0 : i32
    %c0_i32_0 = arith.constant 0 : i32
    return %arg0, %c0_i32 : i32, i32
  }
  func.func @transform_1(%arg0: i32, %arg1: i32) -> (i32, i32) {
    %c0_i32 = arith.constant 0 : i32
    return %arg0, %arg1 : i32, i32
  }
}

</mosaic_0001>

<llo_original>
// kernel: tpu_custom_call.1
$region0: #{tpu_custom_call.1}
  #allocation0 [shape = 'u32[]', space=smem, size = 0x4, offset = 0x4, fixed_abs, tag = 'smem constant byte address 0x4 - core index']
  #allocation1 [shape = 'u32[144,128]{1,0:T(1,128)}', space=vmem, size = 0x12000, scoped, tag = 'internal scratch']
  %s0 = inlined_call_operand.hbm [shape: f32[12,1024], index: 0, kind: input, shape index: {}]
  %s1 = inlined_call_operand.hbm [shape: f32[12,3072], index: 1, kind: output, shape index: {}]
  %s2 = sld [smem:[#allocation0]]
  $region41: #{tpu_custom_call.1} parent=0
    _
  %s4 = ssub.s32 1, %s2
  %s5 = scalar_select 0, %s4, %s2
  $region1: #{tpu_custom_call.1} parent=0
    #allocation2 [shape = 'u8[65536]{0}', space=vmem, size = 0x10000, scoped, tag = 'input window, operand 0, single buffered']
    #allocation3 [shape = 's32[2]{0}', space=sflag, size = 0x8, scoped, tag = 'scoped memory for tpu_custom_call.1']
    #allocation4 [shape = 's32[2]{0}', space=sflag, size = 0x8, scoped, tag = 'scoped memory for tpu_custom_call.1']
    #allocation5 [shape = 'u8[131072]{0}', space=vmem, size = 0x20000, scoped, tag = 'output window, operand 0']
    %6 = vsyncpa [#allocation3], 0
    %7 = vsyncpa [#allocation4], 0
    %s8 = scalar_lea.sflag [#allocation4], 1
    %9 = vsyncpa %s8, 0
    loop: start=0, step=1, limit=5
    $region2: #{tpu_custom_call.1} parent=1 // loop_pre_header
      _
    $region3: #{tpu_custom_call.1} parent=1 // loop_header
      %s11 = sphi 0, %s15
      %p12 = scmp.ge.s32.totalorder %s11, 5
      %s18 = sphi 0, %s30
      %s19 = sphi 0, %s26
      %s20 = sphi 0, %s18
      %s21 = sphi 0, %s19
      %s22 = sphi 0, %s20
      %s23 = sphi 0, %s21
      %s33 = sphi 0, %s35
      %s36 = sphi 0, %s33
      %s37 = sphi 0, %s36
      %s53 = sphi 0, %s37
      %s61 = sphi 0, %s63
      %s64 = sphi 0, %s61
      %s65 = sphi 0, %s64
      %s81 = sphi 0, %s65
    $region4: #{tpu_custom_call.1} parent=1 // loop_header_branch
      %14 = sbr.rel (%p12) target = $region8
    $region5: #{tpu_custom_call.1} parent=1 // loop_body
      %s16 = ssub.s32 %s11, 1
      %s17 = ssub.s32 %s11, 2
      %s24 = sadd.s32 1, %s19
      %p25 = scmp.ge.s32.totalorder %s24, 3
      %s26 = scalar_select %p25, 0, %s24
      %s27 = sadd.s32 1, %s18
      %s28 = scalar_select %p25, %s27, %s18
      %p29 = scmp.ge.s32.totalorder %s28, 1
      %s30 = scalar_select %p29, 0, %s28
      %s31 = ssub.s32 %s18, %s30
      %p32 = scmp.eq.s32.totalorder %s31, 0
      %s34 = sadd.s32 %s33, 1
      %s35 = scalar_select %p32, %s33, %s34
      %p38 = pneg %p32
      %p39 = scmp.eq.s32.totalorder %s11, 2
      %p40 = por %p38, %p39
      %p41 = scmp.ne.s32.totalorder %s33, %s36
      %p42 = scmp.eq.s32.totalorder %s11, 0
      %p43 = por %p41, %p42
      %p44 = scmp.ne.s32.totalorder %s33, %s36
      %p45 = scmp.eq.s32.totalorder %s16, 2
      %p46 = por %p44, %p45
      %p47 = scmp.ne.s32.totalorder %s36, %s37
      %p48 = scmp.eq.s32.totalorder %s16, 0
      %p49 = por %p47, %p48
      %p50 = scmp.ne.s32.totalorder %s36, %s37
      %p51 = scmp.eq.s32.totalorder %s17, 2
      %p52 = por %p50, %p51
      %p54 = scmp.ne.s32.totalorder %s37, %s53
      %p55 = scmp.eq.s32.totalorder %s17, 0
      %p56 = por %p54, %p55
      %s57 = ssub.s32 %s18, %s30
      %s58 = ssub.s32 %s19, %s26
      %s59 = sor.u32 %s57, %s58
      %p60 = scmp.eq.s32.totalorder %s59, 0
      %s62 = sadd.s32 %s61, 1
      %s63 = scalar_select %p60, %s61, %s62
      %p66 = pneg %p60
      %p67 = scmp.eq.s32.totalorder %s11, 2
      %p68 = por %p66, %p67
      %p69 = scmp.ne.s32.totalorder %s61, %s64
      %p70 = scmp.eq.s32.totalorder %s11, 0
      %p71 = por %p69, %p70
      %p72 = scmp.ne.s32.totalorder %s61, %s64
      %p73 = scmp.eq.s32.totalorder %s16, 2
      %p74 = por %p72, %p73
      %p75 = scmp.ne.s32.totalorder %s64, %s65
      %p76 = scmp.eq.s32.totalorder %s16, 0
      %p77 = por %p75, %p76
      %p78 = scmp.ne.s32.totalorder %s64, %s65
      %p79 = scmp.eq.s32.totalorder %s17, 2
      %p80 = por %p78, %p79
      %p82 = scmp.ne.s32.totalorder %s65, %s81
      %p83 = scmp.eq.s32.totalorder %s17, 0
      %p84 = por %p82, %p83
      %p85 = scmp.le.s32.totalorder 1, %s11
      %p86 = scmp.lt.s32.totalorder %s11, 4
      %p87 = pnand %p85, %p86
      %p88 = pneg %p87
      // Predicated region
      $region9: #{tpu_custom_call.1} parent=5 // pred_check
        _
      $region10: #{tpu_custom_call.1} parent=5 // pred_check_branch
        %90 = sbr.rel (%p87) target = $region12
      $region11: #{tpu_custom_call.1} parent=5 // pred_region
        %s91 = ssub.s32 %s11, 1
        // Predicated region
        $region13: #{tpu_custom_call.1} parent=11 // pred_check
          %p92 = pneg %p49
        $region14: #{tpu_custom_call.1} parent=11 // pred_check_branch
          %94 = sbr.rel (%p92) target = $region16
        $region15: #{tpu_custom_call.1} parent=11 // pred_region
          %s95 = smul.u32 2, %s20
          %s97 = ssub.s32 2048, 2048
          %98 = vsyncadd [#allocation3], %s97
          %s99 = smul.addr %s95, 8
          %s100 = smul.addr %s99, 128
          %s101 = scalar_lea.hbm %s0, %s100
          %s102 = sshll.u32 [#allocation2], 4
          %s103 = int_to_ptr.vmem [resolvable:$true] %s102
          %108 = dma.hbm_to_vmem [thread:$0]  %s101, 2048, %s103, [#allocation3], 1024, 1024, 64
        $region16: #{tpu_custom_call.1} parent=11 // pred_fallthru
          _
      $region12: #{tpu_custom_call.1} parent=5 // pred_fallthru
        _
      %p109 = scmp.lt.s32.totalorder %s11, 3
      // Predicated region
      $region17: #{tpu_custom_call.1} parent=5 // pred_check
        %p110 = pneg %p109
      $region18: #{tpu_custom_call.1} parent=5 // pred_check_branch
        %112 = sbr.rel (%p110) target = $region20
      $region19: #{tpu_custom_call.1} parent=5 // pred_region
        _
      $region20: #{tpu_custom_call.1} parent=5 // pred_fallthru
        _
      %p113 = scmp.le.s32.totalorder 1, %s11
      %p114 = scmp.lt.s32.totalorder %s11, 4
      %p115 = pnand %p113, %p114
      %p116 = pneg %p115
      // Predicated region
      $region21: #{tpu_custom_call.1} parent=5 // pred_check
        _
      $region22: #{tpu_custom_call.1} parent=5 // pred_check_branch
        %118 = sbr.rel (%p115) target = $region24
      $region23: #{tpu_custom_call.1} parent=5 // pred_region
        %s119 = ssub.s32 %s11, 1
        // Predicated region
        $region25: #{tpu_custom_call.1} parent=23 // pred_check
          %p120 = pneg %p49
        $region26: #{tpu_custom_call.1} parent=23 // pred_check_branch
          %122 = sbr.rel (%p120) target = $region28
        $region27: #{tpu_custom_call.1} parent=23 // pred_region
          %123 = dma.done [#allocation3], 2048
        $region28: #{tpu_custom_call.1} parent=23 // pred_fallthru
          _
        %p124 = pneg %p49
        %p125 = pneg %p46
        %p126 = pneg %p77
        %p127 = pneg %p74
        %s128 = sand.u32 %s64, 1
        %s129 = scalar_lea.sflag [#allocation4], %s128
        %s130 = sand.u32 %s64, 1
        %s131 = smul.addr %s130, 128
        %s132 = scalar_lea.vmem [#allocation5], %s131
        %s133 = smul.u32 2, %s20
        %s134 = smul.u32 2, %s20
        %s135 = smul.u32 8, %s21
        %v136 = vld [vmem:[#allocation2] sm:$0xff]
        %v137 = vld [vmem:[#allocation2 + $0x8] sm:$0xff]
        %v138 = vld [vmem:[#allocation2 + $0x10] sm:$0xff]
        %v139 = vld [vmem:[#allocation2 + $0x18] sm:$0xff]
        %v140 = vld [vmem:[#allocation2 + $0x20] sm:$0xff]
        %v141 = vld [vmem:[#allocation2 + $0x28] sm:$0xff]
        %v142 = vld [vmem:[#allocation2 + $0x30] sm:$0xff]
        %v143 = vld [vmem:[#allocation2 + $0x38] sm:$0xff]
        %v144 = vld [vmem:[#allocation2 + $0x40] sm:$0xf]
        %v145 = vld [vmem:[#allocation2 + $0x48] sm:$0xf]
        %v146 = vld [vmem:[#allocation2 + $0x50] sm:$0xf]
        %v147 = vld [vmem:[#allocation2 + $0x58] sm:$0xf]
        %v148 = vld [vmem:[#allocation2 + $0x60] sm:$0xf]
        %v149 = vld [vmem:[#allocation2 + $0x68] sm:$0xf]
        %v150 = vld [vmem:[#allocation2 + $0x70] sm:$0xf]
        %v151 = vld [vmem:[#allocation2 + $0x78] sm:$0xf]
        %152 = vst [vmem:[%s132] sm:$0xff] %v136
        %153 = vst [vmem:[%s132 + $0x8] sm:$0xff] %v137
        %154 = vst [vmem:[%s132 + $0x10] sm:$0xff] %v138
        %155 = vst [vmem:[%s132 + $0x18] sm:$0xff] %v139
        %156 = vst [vmem:[%s132 + $0x20] sm:$0xff] %v140
        %157 = vst [vmem:[%s132 + $0x28] sm:$0xff] %v141
        %158 = vst [vmem:[%s132 + $0x30] sm:$0xff] %v142
        %159 = vst [vmem:[%s132 + $0x38] sm:$0xff] %v143
        %160 = vst [vmem:[%s132 + $0x40] sm:$0xf] %v144
        %161 = vst [vmem:[%s132 + $0x48] sm:$0xf] %v145
        %162 = vst [vmem:[%s132 + $0x50] sm:$0xf] %v146
        %163 = vst [vmem:[%s132 + $0x58] sm:$0xf] %v147
        %164 = vst [vmem:[%s132 + $0x60] sm:$0xf] %v148
        %165 = vst [vmem:[%s132 + $0x68] sm:$0xf] %v149
        %166 = vst [vmem:[%s132 + $0x70] sm:$0xf] %v150
        %167 = vst [vmem:[%s132 + $0x78] sm:$0xf] %v151
        %s168 = sand.u32 %s64, 1
        %s169 = scalar_lea.sflag [#allocation4], %s168
        %s170 = sand.u32 %s64, 1
        %s171 = smul.addr %s170, 128
        %s172 = scalar_lea.vmem [#allocation5], %s171
        // Predicated region
        $region29: #{tpu_custom_call.1} parent=23 // pred_check
          %p173 = pneg %p74
        $region30: #{tpu_custom_call.1} parent=23 // pred_check_branch
          %175 = sbr.rel (%p173) target = $region32
        $region31: #{tpu_custom_call.1} parent=23 // pred_region
          %s176 = smul.u32 2, %s20
          %s177 = smul.u32 8, %s21
          %s179 = ssub.s32 2048, 2048
          %180 = vsyncadd %s169, %s179
          %s181 = smul.addr %s176, 24
          %s182 = sadd.s32 %s177, %s181
          %s183 = smul.addr %s182, 128
          %s184 = scalar_lea.hbm %s1, %s183
          %s185 = sshll.u32 %s172, 4
          %s186 = int_to_ptr.vmem [resolvable:$true] %s185
          %191 = dma.vmem_to_hbm [thread:$0]  %s186, 2048, %s184, %s169, 1024, 3072, 64
        $region32: #{tpu_custom_call.1} parent=23 // pred_fallthru
          _
      $region24: #{tpu_custom_call.1} parent=5 // pred_fallthru
        _
      %p192 = scmp.le.s32.totalorder 2, %s11
      // Predicated region
      $region33: #{tpu_custom_call.1} parent=5 // pred_check
        %p193 = pneg %p192
      $region34: #{tpu_custom_call.1} parent=5 // pred_check_branch
        %195 = sbr.rel (%p193) target = $region36
      $region35: #{tpu_custom_call.1} parent=5 // pred_region
        %s196 = ssub.s32 %s11, 2
        // Predicated region
        $region37: #{tpu_custom_call.1} parent=35 // pred_check
          %p197 = pneg %p80
        $region38: #{tpu_custom_call.1} parent=35 // pred_check_branch
          %199 = sbr.rel (%p197) target = $region40
        $region39: #{tpu_custom_call.1} parent=35 // pred_region
          %s200 = sand.u32 %s65, 1
          %s201 = scalar_lea.sflag [#allocation4], %s200
          %s202 = sand.u32 %s65, 1
          %s203 = smul.addr %s202, 128
          %s204 = scalar_lea.vmem [#allocation5], %s203
          %205 = dma.done %s201, 2048
        $region40: #{tpu_custom_call.1} parent=35 // pred_fallthru
          _
      $region36: #{tpu_custom_call.1} parent=5 // pred_fallthru
        _
    $region6: #{tpu_custom_call.1} parent=1 // loop_footer
      %s15 = sadd.s32 1, %s11
    $region7: #{tpu_custom_call.1} parent=1 // loop_footer_branch
      %10 = sbr.rel target = $region3
    $region8: #{tpu_custom_call.1} parent=1 // loop_exit
      _
    %206 = vsyncpa [#allocation3], 1
    %s207 = scalar_lea.sflag [#allocation3], 1
    %208 = vsyncpa %s207, 1
    %209 = vsyncpa [#allocation4], 1
    %s210 = scalar_lea.sflag [#allocation4], 1
    %211 = vsyncpa %s210, 1

</llo_original>
